<compile_context>
chip_gen: v7x
topology: tpu7x:2x2x1
jax: 0.10.0
libtpu: 0.0.40
codegen_flags: <defaults>
</compile_context>

<pallas_src>
import math

import jax
import jax.numpy as jnp
from jax.experimental import pallas as pl
from jax.experimental.pallas import tpu as pltpu


def _build_pe(max_len: int, d_model: int) -> jnp.ndarray:
    """Deterministic sinusoidal positional-encoding table, matches PyTorch init."""
    position = jnp.arange(max_len, dtype=jnp.float32)[:, None]            # (L, 1)
    div_term = jnp.exp(
        jnp.arange(0, d_model, 2, dtype=jnp.float32) * (-math.log(10000.0) / d_model)
    )                                                                      # (D/2,)
    angles = position * div_term                                           # (L, D/2)
    pe = jnp.zeros((max_len, d_model), dtype=jnp.float32)
    pe = pe.at[:, 0::2].set(jnp.sin(angles))
    pe = pe.at[:, 1::2].set(jnp.cos(angles))
    return pe


def _round_up(n: int, m: int) -> int:
    return ((n + m - 1) // m) * m


def _pe_add_kernel(x_ref, pe_ref, o_ref):
    # x_ref / pe_ref / o_ref: (TM, D2) lane-dense packed rows.  Pure VPU add;
    # kernel is memory-bound and sits on the HBM roofline.
    o_ref[...] = x_ref[...] + pe_ref[...]


def layer_positional_encoding(x: jnp.ndarray,
                              smiles_indices: jnp.ndarray,
                              pe: jnp.ndarray,
                              *,
                              tile_rows: int = 1024) -> jnp.ndarray:
    """x: (B, S, D), smiles_indices: (B, S) int, pe: (max_len, D)."""
    B, S, D = x.shape
    L, D_pe = pe.shape
    assert D == D_pe, "pe table width must match d_model"
    N = B * S

    # Clamp indices for bounds safety (PyTorch would index-error OOB).
    idx = jnp.clip(smiles_indices.reshape(N).astype(jnp.int32), 0, L - 1)

    # Pre-gather the pe rows (same byte count as x).  The Pallas kernel then
    # streams x and pe_rows and does a lane-dense add.
    pe_rows = pe.astype(x.dtype)[idx]                                      # (N, D)
    x_flat = x.reshape(N, D)

    # Lane packing: make the last dim a multiple of 128 lanes so stores are
    # unmasked vst (not vst.msk).
    if D < 128 and 128 % D == 0:
        G, Dp = 128 // D, D                       # pack G tokens per row
    else:
        G, Dp = 1, _round_up(D, 128)              # pad the lane dim instead
        if Dp != D:
            x_flat = jnp.pad(x_flat, ((0, 0), (0, Dp - D)))
            pe_rows = jnp.pad(pe_rows, ((0, 0), (0, Dp - D)))
    D2 = G * Dp

    # Packed-row count and tile size.  Prefer grid >= 2 so v7x's two
    # TensorCores both get work; otherwise the biggest multiple-of-8 tile.
    rows_raw = -(-N // G)
    if rows_raw >= 2 * tile_rows:
        TM = tile_rows
    elif rows_raw >= 16:
        TM = _round_up(-(-rows_raw // 2), 8)
    else:
        TM = _round_up(rows_raw, 8)
    rows = _round_up(rows_raw, TM)

    n_pad = rows * G
    pad = n_pad - N
    if pad:
        x_flat = jnp.pad(x_flat, ((0, pad), (0, 0)))
        pe_rows = jnp.pad(pe_rows, ((0, pad), (0, 0)))

    x2 = x_flat.reshape(rows, D2)                                          # (rows, G*Dp)
    p2 = pe_rows.reshape(rows, D2)

    grid = (rows // TM,)
    out2 = pl.pallas_call(
        _pe_add_kernel,
        out_shape=jax.ShapeDtypeStruct((rows, D2), x.dtype),
        grid=grid,
        in_specs=[
            pl.BlockSpec((TM, D2), lambda i: (i, 0)),   # x tile (lane-dense)
            pl.BlockSpec((TM, D2), lambda i: (i, 0)),   # gathered pe tile
        ],
        out_specs=pl.BlockSpec((TM, D2), lambda i: (i, 0)),
        compiler_params=pltpu.CompilerParams(
            dimension_semantics=("parallel",),          # shard tiles on v7x's 2 TCs
        ),
    )(x2, p2)

    # Dropout in eval mode is the identity.
    out_flat = out2.reshape(n_pad, Dp)[:N, :D]
    return out_flat.reshape(B, S, D)


if __name__ == "__main__":
    # Small shapes consistent with the module: batch=2, seq=8, d_model=32, max_len=64.
    B, S, D, MAX_LEN = 2, 8, 32, 64

    key = jax.random.PRNGKey(0)
    kx, ki = jax.random.split(key)
    x = jax.random.normal(kx, (B, S, D), dtype=jnp.float32)
    smiles_indices = jax.random.randint(ki, (B, S), minval=0, maxval=MAX_LEN,
                                        dtype=jnp.int32)

    pe = _build_pe(MAX_LEN, D)

    out = layer_positional_encoding(x, smiles_indices, pe)
    out = jax.block_until_ready(out)

    # Reference (pure JAX) check of the forward semantics.
    ref = x + pe[smiles_indices]
    assert out.shape == (B, S, D) and out.dtype == x.dtype
    assert jnp.allclose(out, ref, atol=1e-6, rtol=1e-6)

    print("KERNEL_OK")
</pallas_src>

<mosaic_0001>
module attributes {stable_mosaic.version = 11 : i64} {
  func.func @_pe_add_kernel(%arg0: i32, %arg1: memref<8x128xf32, #tpu.memory_space<vmem>>, %arg2: memref<8x128xf32, #tpu.memory_space<vmem>>, %arg3: memref<8x128xf32, #tpu.memory_space<vmem>>) attributes {dimension_semantics = [#tpu.dimension_semantics<parallel>], iteration_bounds = array<i64: 1>, scalar_prefetch = 0 : i64, scratch_operands = 0 : i64, tpu.core_type = #tpu.core_type<tc>, window_params = [{transform_indices = @transform_0, window_bounds = array<i64: 8, 128>}, {transform_indices = @transform_1, window_bounds = array<i64: 8, 128>}, {transform_indices = @transform_2, window_bounds = array<i64: 8, 128>}]} {
    %c0 = arith.constant 0 : index
    %c0_0 = arith.constant 0 : index
    %0 = vector.load %arg1[%c0, %c0_0] : memref<8x128xf32, #tpu.memory_space<vmem>>, vector<8x128xf32>
    %c0_1 = arith.constant 0 : index
    %c0_2 = arith.constant 0 : index
    %1 = vector.load %arg2[%c0_1, %c0_2] : memref<8x128xf32, #tpu.memory_space<vmem>>, vector<8x128xf32>
    %2 = arith.addf %0, %1 : vector<8x128xf32>
    %c0_3 = arith.constant 0 : index
    %c0_4 = arith.constant 0 : index
    %3 = vector.load %arg3[%c0_3, %c0_4] : memref<8x128xf32, #tpu.memory_space<vmem>>, vector<8x128xf32>
    tpu.vector_store %arg3[%c0_3, %c0_4], %2 {strides = array<i32>} : memref<8x128xf32, #tpu.memory_space<vmem>>, vector<8x128xf32>,
    return
  }
  func.func @transform_0(%arg0: i32) -> (i32, i32) {
    %c0_i32 = arith.constant 0 : i32
    %c0_i32_0 = arith.constant 0 : i32
    return %arg0, %c0_i32 : i32, i32
  }
  func.func @transform_1(%arg0: i32) -> (i32, i32) {
    %c0_i32 = arith.constant 0 : i32
    %c0_i32_0 = arith.constant 0 : i32
    return %arg0, %c0_i32 : i32, i32
  }
  func.func @transform_2(%arg0: i32) -> (i32, i32) {
    %c0_i32 = arith.constant 0 : i32
    %c0_i32_0 = arith.constant 0 : i32
    return %arg0, %c0_i32 : i32, i32
  }
}

</mosaic_0001>

<llo_original>
// kernel: tpu_custom_call.1
$region0: #{tpu_custom_call.1}
  #allocation0 [shape = 'u32[]', space=smem, size = 0x4, offset = 0x4, fixed_abs, tag = 'smem constant byte address 0x4 - core index']
  #allocation1 [shape = 'u32[144,128]{1,0:T(1,128)}', space=vmem, size = 0x12000, scoped, tag = 'internal scratch']
  %s0 = inlined_call_operand.hbm [shape: f32[8,128], index: 0, kind: input, shape index: {}]
  %s1 = inlined_call_operand.hbm [shape: f32[8,128], index: 1, kind: input, shape index: {}]
  %s2 = inlined_call_operand.hbm [shape: f32[8,128], index: 2, kind: output, shape index: {}]
  %s3 = sld [smem:[#allocation0]]
  $region26: #{tpu_custom_call.1} parent=0
    _
  %s5 = ssub.s32 1, %s3
  %s6 = scalar_select 0, %s5, %s3
  $region1: #{tpu_custom_call.1} parent=0
    #allocation2 [shape = 'u8[4096]{0}', space=vmem, size = 0x1000, scoped, tag = 'input window, operand 0, single buffered']
    #allocation3 [shape = 's32[1]{0}', space=sflag, size = 0x4, scoped, tag = 'scoped memory for tpu_custom_call.1']
    #allocation4 [shape = 's32[1]{0}', space=sflag, size = 0x4, scoped, tag = 'scoped memory for tpu_custom_call.1']
    #allocation5 [shape = 'u8[4096]{0}', space=vmem, size = 0x1000, scoped, tag = 'input window, operand 1, single buffered']
    #allocation6 [shape = 's32[1]{0}', space=sflag, size = 0x4, scoped, tag = 'scoped memory for tpu_custom_call.1']
    #allocation7 [shape = 'u8[4096]{0}', space=vmem, size = 0x1000, scoped, tag = 'output window, operand 0, single buffered']
    %7 = vsyncpa [#allocation3], 0
    %8 = vsyncpa [#allocation6], 0
    %9 = vsyncpa [#allocation4], 0
    // Predicated region
    $region2: #{tpu_custom_call.1} parent=1 // pred_check
      _
    $region3: #{tpu_custom_call.1} parent=1 // pred_check_branch
      %11 = sbr.rel (0) target = $region5
    $region4: #{tpu_custom_call.1} parent=1 // pred_region
      %s13 = ssub.s32 128, 128
      %14 = vsyncadd [#allocation3], %s13
      %s16 = sshll.u32 [#allocation2], 4
      %s17 = int_to_ptr.vmem [resolvable:$true] %s16
      %19 = dma.hbm_to_vmem [thread:$0]  %s0, 128, %s17, [#allocation3]
    $region5: #{tpu_custom_call.1} parent=1 // pred_fallthru
      _
    // Predicated region
    $region6: #{tpu_custom_call.1} parent=1 // pred_check
      _
    $region7: #{tpu_custom_call.1} parent=1 // pred_check_branch
      %21 = sbr.rel (0) target = $region9
    $region8: #{tpu_custom_call.1} parent=1 // pred_region
      %s23 = ssub.s32 128, 128
      %24 = vsyncadd [#allocation6], %s23
      %s26 = sshll.u32 [#allocation5], 4
      %s27 = int_to_ptr.vmem [resolvable:$true] %s26
      %29 = dma.hbm_to_vmem [thread:$0]  %s1, 128, %s27, [#allocation6]
    $region9: #{tpu_custom_call.1} parent=1 // pred_fallthru
      _
    // Predicated region
    $region10: #{tpu_custom_call.1} parent=1 // pred_check
      _
    $region11: #{tpu_custom_call.1} parent=1 // pred_check_branch
      %31 = sbr.rel (0) target = $region13
    $region12: #{tpu_custom_call.1} parent=1 // pred_region
      %32 = dma.done [#allocation3], 128
    $region13: #{tpu_custom_call.1} parent=1 // pred_fallthru
      _
    // Predicated region
    $region14: #{tpu_custom_call.1} parent=1 // pred_check
      _
    $region15: #{tpu_custom_call.1} parent=1 // pred_check_branch
      %34 = sbr.rel (0) target = $region17
    $region16: #{tpu_custom_call.1} parent=1 // pred_region
      %35 = dma.done [#allocation6], 128
    $region17: #{tpu_custom_call.1} parent=1 // pred_fallthru
      _
    %v36 = vld [vmem:[#allocation2] sm:$0xff]
    %v37 = vld [vmem:[#allocation5] sm:$0xff]
    %v38 = vadd.f32 %v36, %v37
    %39 = vst [vmem:[#allocation7] sm:$0xff] %v38
    // Predicated region
    $region18: #{tpu_custom_call.1} parent=1 // pred_check
      _
    $region19: #{tpu_custom_call.1} parent=1 // pred_check_branch
      %41 = sbr.rel (0) target = $region21
    $region20: #{tpu_custom_call.1} parent=1 // pred_region
      %s43 = ssub.s32 128, 128
      %44 = vsyncadd [#allocation4], %s43
      %s46 = sshll.u32 [#allocation7], 4
      %s47 = int_to_ptr.vmem [resolvable:$true] %s46
      %49 = dma.vmem_to_hbm [thread:$0]  %s47, 128, %s2, [#allocation4]
    $region21: #{tpu_custom_call.1} parent=1 // pred_fallthru
      _
    // Predicated region
    $region22: #{tpu_custom_call.1} parent=1 // pred_check
      _
    $region23: #{tpu_custom_call.1} parent=1 // pred_check_branch
      %51 = sbr.rel (0) target = $region25
    $region24: #{tpu_custom_call.1} parent=1 // pred_region
      %52 = dma.done [#allocation4], 128
    $region25: #{tpu_custom_call.1} parent=1 // pred_fallthru
      _
    %53 = vsyncpa [#allocation3], 1
    %54 = vsyncpa [#allocation6], 1
    %55 = vsyncpa [#allocation4], 1

</llo_original>
